<compile_context>
chip_gen: v5e
topology: v5e:2x2
jax: 0.10.0
libtpu: 0.0.40
codegen_flags: <defaults>
</compile_context>

<pallas_src>
import math
import functools

import jax
import jax.numpy as jnp
from jax import lax
from jax.experimental import pallas as pl
from jax.experimental.pallas import tpu as pltpu


def _self_attention_kernel(causal: bool, num_heads: int, d_head: int,
                           q_ref, k_ref, v_ref,
                           wq_ref, bq_ref, wk_ref, bk_ref,
                           wv_ref, bv_ref, wo_ref, bo_ref,
                           o_ref):
    """One grid step == one batch element.  All hot-path compute lives here."""
    f32 = jnp.float32
    cdt = wq_ref.dtype                     # MXU operand dtype (f32 or bf16)
    xq = q_ref[0]                          # (S, D)
    xk = k_ref[0]
    xv = v_ref[0]
    S = xq.shape[0]
    scale = 1.0 / math.sqrt(d_head)

    # In-projections: lane-dense (S, D) x (D, D) MXU matmuls, f32 accumulation.
    qp = jnp.dot(xq, wq_ref[...], preferred_element_type=f32) + bq_ref[...]
    kp = jnp.dot(xk, wk_ref[...], preferred_element_type=f32) + bk_ref[...]
    vp = jnp.dot(xv, wv_ref[...], preferred_element_type=f32) + bv_ref[...]

    # Fold 1/sqrt(d_head) into q once in f32 (equivalent to scaling each
    # (S, S) score matrix; -inf masked positions are unaffected by the scale).
    qp = qp * scale

    # MXU operands in the compute dtype; softmax / accumulation stay f32.
    qm = qp.astype(cdt)
    km = kp.astype(cdt)
    vm = vp.astype(cdt)

    if causal:
        row = lax.broadcasted_iota(jnp.int32, (S, S), 0)
        col = lax.broadcasted_iota(jnp.int32, (S, S), 1)
        causal_mask = col > row            # hoisted out of the head loop

    # Per-head attention.  d_head is typically below the MXU width, so a
    # head-batched dot_general would be unrolled into the same per-head MXU
    # ops anyway; the static loop keeps every operand 2-D (no minor-dim
    # reshape/transpose relayouts) and feeds the MXU directly.
    # TODO(synk): for large S (e.g. 64x64 latents -> S=4096), switch to a
    # flash/online-softmax key-tile grid axis ("arbitrary") so only
    # (tile_q, tile_k) scores are materialized instead of (S, S) per head.
    approx_recip = cdt != f32              # EUP vrcp is plenty for bf16 path
    ctx_heads = []
    dims_nt = (((1,), (1,)), ((), ()))     # contract the shared d_head axis
    for h in range(num_heads):
        sl = slice(h * d_head, (h + 1) * d_head)
        q_h = qm[:, sl]                    # (S, d_head)
        k_h = km[:, sl]
        v_h = vm[:, sl]
        s = lax.dot_general(q_h, k_h, dims_nt,
                            preferred_element_type=f32)        # (S, S) f32
        if causal:
            s = jnp.where(causal_mask, -jnp.inf, s)
        m = jnp.max(s, axis=-1, keepdims=True)
        p = jnp.exp(s - m)
        l = jnp.sum(p, axis=-1, keepdims=True)
        p = p * pl.reciprocal(l, approx=approx_recip)           # softmax, f32
        ctx_heads.append(jnp.dot(p.astype(cdt), v_h,
                                 preferred_element_type=f32))   # (S, d_head)

    # Merge heads once into a lane-dense (S, D) value, then a single dense
    # output projection (full-K MXU matmul), bias add in f32.
    ctx = jnp.concatenate(ctx_heads, axis=-1)
    out = jnp.dot(ctx.astype(cdt), wo_ref[...],
                  preferred_element_type=f32) + bo_ref[...]
    o_ref[0] = out.astype(o_ref.dtype)


def self_attention_pallas(q, k, v, params, *, num_heads: int, causal: bool = False,
                          compute_dtype=None, vmem_limit_bytes=None):
    """params = (Wq, bq, Wk, bk, Wv, bv, Wo, bo) with W in (out, in) torch layout.

    compute_dtype: optional dtype (e.g. jnp.bfloat16) for tokens / weights /
    MXU operands; softmax and matmul accumulation stay float32.
    """
    B, S, D = q.shape
    assert D % num_heads == 0, "d_emb must be divisible by num_heads"
    d_head = D // num_heads
    out_dtype = q.dtype
    Wq, bq, Wk, bk, Wv, bv, Wo, bo = params

    # Glue: transpose weights to (in, out) so the kernel does x @ W; biases as
    # 2-D (1, D) f32 (added after f32 accumulation on the MXU result).
    wq_t, wk_t, wv_t, wo_t = (w.T for w in (Wq, Wk, Wv, Wo))
    bq2, bk2, bv2, bo2 = (b.astype(jnp.float32).reshape(1, D)
                          for b in (bq, bk, bv, bo))
    if compute_dtype is not None:
        cdt = jnp.dtype(compute_dtype)
        q, k, v = (x.astype(cdt) for x in (q, k, v))
        wq_t, wk_t, wv_t, wo_t = (w.astype(cdt) for w in (wq_t, wk_t, wv_t, wo_t))

    kernel = functools.partial(_self_attention_kernel, causal, num_heads, d_head)

    tok_spec = pl.BlockSpec((1, S, D), lambda b: (b, 0, 0))
    w_spec = pl.BlockSpec((D, D), lambda b: (0, 0))   # constant -> VMEM resident
    b_spec = pl.BlockSpec((1, D), lambda b: (0, 0))

    grid_spec = pltpu.PrefetchScalarGridSpec(
        num_scalar_prefetch=0,
        grid=(B,),
        in_specs=[tok_spec, tok_spec, tok_spec,
                  w_spec, b_spec, w_spec, b_spec,
                  w_spec, b_spec, w_spec, b_spec],
        out_specs=pl.BlockSpec((1, S, D), lambda b: (b, 0, 0)),
    )

    # TODO(synk): for big B/S/D, add a query-tile grid axis (flash-style online
    # softmax over key tiles) and size vmem_limit_bytes for weights plus
    # double-buffered token/score tiles (v7x has only 64 MiB VMEM).
    return pl.pallas_call(
        kernel,
        out_shape=jax.ShapeDtypeStruct((B, S, D), out_dtype),
        grid_spec=grid_spec,
        compiler_params=pltpu.CompilerParams(
            dimension_semantics=("parallel",),
            vmem_limit_bytes=vmem_limit_bytes),
    )(q, k, v, wq_t, bq2, wk_t, bk2, wv_t, bv2, wo_t, bo2)


def self_attention_reference(q, k, v, params, *, num_heads: int, causal: bool = False):
    """Pure-JAX reference reproducing the PyTorch forward semantics."""
    B, S, D = q.shape
    d_head = D // num_heads
    Wq, bq, Wk, bk, Wv, bv, Wo, bo = params
    qp = q @ Wq.T + bq
    kp = k @ Wk.T + bk
    vp = v @ Wv.T + bv
    qh = qp.reshape(B, S, num_heads, d_head).transpose(0, 2, 1, 3)
    kh = kp.reshape(B, S, num_heads, d_head).transpose(0, 2, 1, 3)
    vh = vp.reshape(B, S, num_heads, d_head).transpose(0, 2, 1, 3)
    w = qh @ kh.transpose(0, 1, 3, 2)
    if causal:
        mask = jnp.triu(jnp.ones((S, S), dtype=bool), 1)
        w = jnp.where(mask, -jnp.inf, w)
    w = w / math.sqrt(d_head)
    w = jax.nn.softmax(w, axis=-1)
    o = (w @ vh).transpose(0, 2, 1, 3).reshape(B, S, D)
    return o @ Wo.T + bo


if __name__ == "__main__":
    B, S, D, H = 2, 8, 32, 4   # batch, seq, d_emb, num_heads  -> d_head = 8

    key = jax.random.PRNGKey(0)
    keys = jax.random.split(key, 12)
    q = jax.random.normal(keys[0], (B, S, D), jnp.float32)
    k = jax.random.normal(keys[1], (B, S, D), jnp.float32)
    v = jax.random.normal(keys[2], (B, S, D), jnp.float32)

    init_scale = 1.0 / math.sqrt(D)
    params = (
        jax.random.normal(keys[3], (D, D), jnp.float32) * init_scale,   # Wq
        jax.random.normal(keys[4], (D,), jnp.float32) * init_scale,     # bq
        jax.random.normal(keys[5], (D, D), jnp.float32) * init_scale,   # Wk
        jax.random.normal(keys[6], (D,), jnp.float32) * init_scale,     # bk
        jax.random.normal(keys[7], (D, D), jnp.float32) * init_scale,   # Wv
        jax.random.normal(keys[8], (D,), jnp.float32) * init_scale,     # bv
        jax.random.normal(keys[9], (D, D), jnp.float32) * init_scale,   # Wo
        jax.random.normal(keys[10], (D,), jnp.float32) * init_scale,    # bo
    )

    ok = True

    # f32 path: tight tolerance against the pure-JAX reference.
    for causal in (False, True):
        out = self_attention_pallas(q, k, v, params, num_heads=H, causal=causal)
        out = jax.block_until_ready(out)
        ref = self_attention_reference(q, k, v, params, num_heads=H, causal=causal)
        if not jnp.allclose(out, ref, rtol=1e-5, atol=1e-5):
            ok = False
            print(f"MISMATCH f32 causal={causal}: "
                  f"max abs err {float(jnp.max(jnp.abs(out - ref)))}")

    # bf16 MXU-operand path: loose tolerance (softmax/accumulation stay f32).
    for causal in (False, True):
        out = self_attention_pallas(q, k, v, params, num_heads=H, causal=causal,
                                    compute_dtype=jnp.bfloat16)
        out = jax.block_until_ready(out)
        ref = self_attention_reference(q, k, v, params, num_heads=H, causal=causal)
        if not jnp.allclose(out, ref, rtol=1e-1, atol=1e-1):
            ok = False
            print(f"MISMATCH bf16 causal={causal}: "
                  f"max abs err {float(jnp.max(jnp.abs(out - ref)))}")

    if ok:
        print("KERNEL_OK")
</pallas_src>

<mosaic_0001>
module attributes {stable_mosaic.version = 11 : i64} {
  func.func @_self_attention_kernel(%arg0: i32, %arg1: memref<1x8x32xf32, #tpu.memory_space<vmem>>, %arg2: memref<1x8x32xf32, #tpu.memory_space<vmem>>, %arg3: memref<1x8x32xf32, #tpu.memory_space<vmem>>, %arg4: memref<32x32xf32, #tpu.memory_space<vmem>>, %arg5: memref<1x32xf32, #tpu.memory_space<vmem>>, %arg6: memref<32x32xf32, #tpu.memory_space<vmem>>, %arg7: memref<1x32xf32, #tpu.memory_space<vmem>>, %arg8: memref<32x32xf32, #tpu.memory_space<vmem>>, %arg9: memref<1x32xf32, #tpu.memory_space<vmem>>, %arg10: memref<32x32xf32, #tpu.memory_space<vmem>>, %arg11: memref<1x32xf32, #tpu.memory_space<vmem>>, %arg12: memref<1x8x32xf32, #tpu.memory_space<vmem>>) attributes {dimension_semantics = [#tpu.dimension_semantics<parallel>], iteration_bounds = array<i64: 2>, scalar_prefetch = 0 : i64, scratch_operands = 0 : i64, tpu.core_type = #tpu.core_type<tc>, window_params = [{transform_indices = @transform_0, window_bounds = array<i64: 1, 8, 32>}, {transform_indices = @transform_1, window_bounds = array<i64: 1, 8, 32>}, {transform_indices = @transform_2, window_bounds = array<i64: 1, 8, 32>}, {pipeline_mode = #tpu.pipeline_mode<synchronous>, transform_indices = @transform_3, window_bounds = array<i64: 32, 32>}, {pipeline_mode = #tpu.pipeline_mode<synchronous>, transform_indices = @transform_4, window_bounds = array<i64: 1, 32>}, {pipeline_mode = #tpu.pipeline_mode<synchronous>, transform_indices = @transform_5, window_bounds = array<i64: 32, 32>}, {pipeline_mode = #tpu.pipeline_mode<synchronous>, transform_indices = @transform_6, window_bounds = array<i64: 1, 32>}, {pipeline_mode = #tpu.pipeline_mode<synchronous>, transform_indices = @transform_7, window_bounds = array<i64: 32, 32>}, {pipeline_mode = #tpu.pipeline_mode<synchronous>, transform_indices = @transform_8, window_bounds = array<i64: 1, 32>}, {pipeline_mode = #tpu.pipeline_mode<synchronous>, transform_indices = @transform_9, window_bounds = array<i64: 32, 32>}, {pipeline_mode = #tpu.pipeline_mode<synchronous>, transform_indices = @transform_10, window_bounds = array<i64: 1, 32>}, {transform_indices = @transform_11, window_bounds = array<i64: 1, 8, 32>}]} {
    %c0 = arith.constant 0 : index
    %c0_0 = arith.constant 0 : index
    %c0_1 = arith.constant 0 : index
    %0 = vector.load %arg1[%c0, %c0_0, %c0_1] : memref<1x8x32xf32, #tpu.memory_space<vmem>>, vector<1x8x32xf32>
    %1 = vector.shape_cast %0 : vector<1x8x32xf32> to vector<8x32xf32>
    %c0_2 = arith.constant 0 : index
    %c0_3 = arith.constant 0 : index
    %c0_4 = arith.constant 0 : index
    %2 = vector.load %arg2[%c0_2, %c0_3, %c0_4] : memref<1x8x32xf32, #tpu.memory_space<vmem>>, vector<1x8x32xf32>
    %3 = vector.shape_cast %2 : vector<1x8x32xf32> to vector<8x32xf32>
    %c0_5 = arith.constant 0 : index
    %c0_6 = arith.constant 0 : index
    %c0_7 = arith.constant 0 : index
    %4 = vector.load %arg3[%c0_5, %c0_6, %c0_7] : memref<1x8x32xf32, #tpu.memory_space<vmem>>, vector<1x8x32xf32>
    %5 = vector.shape_cast %4 : vector<1x8x32xf32> to vector<8x32xf32>
    %c0_8 = arith.constant 0 : index
    %c0_9 = arith.constant 0 : index
    %6 = vector.load %arg4[%c0_8, %c0_9] : memref<32x32xf32, #tpu.memory_space<vmem>>, vector<32x32xf32>
    %cst = arith.constant dense<0.000000e+00> : vector<8x32xf32>
    %7 = tpu.matmul %1, %6, %cst {dimension_numbers = #tpu.dot_dimension_numbers<[1], [0], [0], [1], [0, 0, 1, 1], [], []>} : vector<8x32xf32>, vector<32x32xf32>, vector<8x32xf32> -> vector<8x32xf32>
    %c0_10 = arith.constant 0 : index
    %c0_11 = arith.constant 0 : index
    %8 = vector.load %arg5[%c0_10, %c0_11] : memref<1x32xf32, #tpu.memory_space<vmem>>, vector<1x32xf32>
    %9 = vector.broadcast %8 : vector<1x32xf32> to vector<8x32xf32>
    %10 = arith.addf %7, %9 : vector<8x32xf32>
    %c0_12 = arith.constant 0 : index
    %c0_13 = arith.constant 0 : index
    %11 = vector.load %arg6[%c0_12, %c0_13] : memref<32x32xf32, #tpu.memory_space<vmem>>, vector<32x32xf32>
    %cst_14 = arith.constant dense<0.000000e+00> : vector<8x32xf32>
    %12 = tpu.matmul %3, %11, %cst_14 {dimension_numbers = #tpu.dot_dimension_numbers<[1], [0], [0], [1], [0, 0, 1, 1], [], []>} : vector<8x32xf32>, vector<32x32xf32>, vector<8x32xf32> -> vector<8x32xf32>
    %c0_15 = arith.constant 0 : index
    %c0_16 = arith.constant 0 : index
    %13 = vector.load %arg7[%c0_15, %c0_16] : memref<1x32xf32, #tpu.memory_space<vmem>>, vector<1x32xf32>
    %14 = vector.broadcast %13 : vector<1x32xf32> to vector<8x32xf32>
    %15 = arith.addf %12, %14 : vector<8x32xf32>
    %c0_17 = arith.constant 0 : index
    %c0_18 = arith.constant 0 : index
    %16 = vector.load %arg8[%c0_17, %c0_18] : memref<32x32xf32, #tpu.memory_space<vmem>>, vector<32x32xf32>
    %cst_19 = arith.constant dense<0.000000e+00> : vector<8x32xf32>
    %17 = tpu.matmul %5, %16, %cst_19 {dimension_numbers = #tpu.dot_dimension_numbers<[1], [0], [0], [1], [0, 0, 1, 1], [], []>} : vector<8x32xf32>, vector<32x32xf32>, vector<8x32xf32> -> vector<8x32xf32>
    %c0_20 = arith.constant 0 : index
    %c0_21 = arith.constant 0 : index
    %18 = vector.load %arg9[%c0_20, %c0_21] : memref<1x32xf32, #tpu.memory_space<vmem>>, vector<1x32xf32>
    %19 = vector.broadcast %18 : vector<1x32xf32> to vector<8x32xf32>
    %20 = arith.addf %17, %19 : vector<8x32xf32>
    %cst_22 = arith.constant 0.353553385 : f32
    %21 = vector.broadcast %cst_22 : f32 to vector<8x32xf32>
    %22 = arith.mulf %10, %21 : vector<8x32xf32>
    %23 = vector.extract_strided_slice %22 {offsets = [0, 0], sizes = [8, 8], strides = [1, 1]} : vector<8x32xf32> to vector<8x8xf32>
    %24 = vector.extract_strided_slice %15 {offsets = [0, 0], sizes = [8, 8], strides = [1, 1]} : vector<8x32xf32> to vector<8x8xf32>
    %25 = vector.extract_strided_slice %20 {offsets = [0, 0], sizes = [8, 8], strides = [1, 1]} : vector<8x32xf32> to vector<8x8xf32>
    %cst_23 = arith.constant dense<0.000000e+00> : vector<8x8xf32>
    %26 = tpu.matmul %23, %24, %cst_23 {dimension_numbers = #tpu.dot_dimension_numbers<[1], [1], [0], [0], [0, 0, 1, 0], [], []>} : vector<8x8xf32>, vector<8x8xf32>, vector<8x8xf32> -> vector<8x8xf32>
    %cst_24 = arith.constant dense<0xFF800000> : vector<8xf32>
    %27 = vector.multi_reduction <maximumf>, %26, %cst_24 [1] : vector<8x8xf32> to vector<8xf32>
    %28 = vector.shape_cast %27 : vector<8xf32> to vector<8x1xf32>
    %29 = vector.broadcast %28 : vector<8x1xf32> to vector<8x8xf32>
    %30 = arith.subf %26, %29 : vector<8x8xf32>
    %31 = math.exp %30 : vector<8x8xf32>
    %cst_25 = arith.constant dense<0.000000e+00> : vector<8xf32>
    %32 = vector.multi_reduction <add>, %31, %cst_25 [1] : vector<8x8xf32> to vector<8xf32>
    %33 = vector.shape_cast %32 : vector<8xf32> to vector<8x1xf32>
    %34 = tpu.reciprocal %33 : vector<8x1xf32> -> vector<8x1xf32>
    %35 = vector.broadcast %34 : vector<8x1xf32> to vector<8x8xf32>
    %36 = arith.mulf %31, %35 : vector<8x8xf32>
    %cst_26 = arith.constant dense<0.000000e+00> : vector<8x8xf32>
    %37 = tpu.matmul %36, %25, %cst_26 {dimension_numbers = #tpu.dot_dimension_numbers<[1], [0], [0], [1], [0, 0, 1, 1], [], []>} : vector<8x8xf32>, vector<8x8xf32>, vector<8x8xf32> -> vector<8x8xf32>
    %38 = vector.extract_strided_slice %22 {offsets = [0, 8], sizes = [8, 8], strides = [1, 1]} : vector<8x32xf32> to vector<8x8xf32>
    %39 = vector.extract_strided_slice %15 {offsets = [0, 8], sizes = [8, 8], strides = [1, 1]} : vector<8x32xf32> to vector<8x8xf32>
    %40 = vector.extract_strided_slice %20 {offsets = [0, 8], sizes = [8, 8], strides = [1, 1]} : vector<8x32xf32> to vector<8x8xf32>
    %cst_27 = arith.constant dense<0.000000e+00> : vector<8x8xf32>
    %41 = tpu.matmul %38, %39, %cst_27 {dimension_numbers = #tpu.dot_dimension_numbers<[1], [1], [0], [0], [0, 0, 1, 0], [], []>} : vector<8x8xf32>, vector<8x8xf32>, vector<8x8xf32> -> vector<8x8xf32>
    %cst_28 = arith.constant dense<0xFF800000> : vector<8xf32>
    %42 = vector.multi_reduction <maximumf>, %41, %cst_28 [1] : vector<8x8xf32> to vector<8xf32>
    %43 = vector.shape_cast %42 : vector<8xf32> to vector<8x1xf32>
    %44 = vector.broadcast %43 : vector<8x1xf32> to vector<8x8xf32>
    %45 = arith.subf %41, %44 : vector<8x8xf32>
    %46 = math.exp %45 : vector<8x8xf32>
    %cst_29 = arith.constant dense<0.000000e+00> : vector<8xf32>
    %47 = vector.multi_reduction <add>, %46, %cst_29 [1] : vector<8x8xf32> to vector<8xf32>
    %48 = vector.shape_cast %47 : vector<8xf32> to vector<8x1xf32>
    %49 = tpu.reciprocal %48 : vector<8x1xf32> -> vector<8x1xf32>
    %50 = vector.broadcast %49 : vector<8x1xf32> to vector<8x8xf32>
    %51 = arith.mulf %46, %50 : vector<8x8xf32>
    %cst_30 = arith.constant dense<0.000000e+00> : vector<8x8xf32>
    %52 = tpu.matmul %51, %40, %cst_30 {dimension_numbers = #tpu.dot_dimension_numbers<[1], [0], [0], [1], [0, 0, 1, 1], [], []>} : vector<8x8xf32>, vector<8x8xf32>, vector<8x8xf32> -> vector<8x8xf32>
    %53 = vector.extract_strided_slice %22 {offsets = [0, 16], sizes = [8, 8], strides = [1, 1]} : vector<8x32xf32> to vector<8x8xf32>
    %54 = vector.extract_strided_slice %15 {offsets = [0, 16], sizes = [8, 8], strides = [1, 1]} : vector<8x32xf32> to vector<8x8xf32>
    %55 = vector.extract_strided_slice %20 {offsets = [0, 16], sizes = [8, 8], strides = [1, 1]} : vector<8x32xf32> to vector<8x8xf32>
    %cst_31 = arith.constant dense<0.000000e+00> : vector<8x8xf32>
    %56 = tpu.matmul %53, %54, %cst_31 {dimension_numbers = #tpu.dot_dimension_numbers<[1], [1], [0], [0], [0, 0, 1, 0], [], []>} : vector<8x8xf32>, vector<8x8xf32>, vector<8x8xf32> -> vector<8x8xf32>
    %cst_32 = arith.constant dense<0xFF800000> : vector<8xf32>
    %57 = vector.multi_reduction <maximumf>, %56, %cst_32 [1] : vector<8x8xf32> to vector<8xf32>
    %58 = vector.shape_cast %57 : vector<8xf32> to vector<8x1xf32>
    %59 = vector.broadcast %58 : vector<8x1xf32> to vector<8x8xf32>
    %60 = arith.subf %56, %59 : vector<8x8xf32>
    %61 = math.exp %60 : vector<8x8xf32>
    %cst_33 = arith.constant dense<0.000000e+00> : vector<8xf32>
    %62 = vector.multi_reduction <add>, %61, %cst_33 [1] : vector<8x8xf32> to vector<8xf32>
    %63 = vector.shape_cast %62 : vector<8xf32> to vector<8x1xf32>
    %64 = tpu.reciprocal %63 : vector<8x1xf32> -> vector<8x1xf32>
    %65 = vector.broadcast %64 : vector<8x1xf32> to vector<8x8xf32>
    %66 = arith.mulf %61, %65 : vector<8x8xf32>
    %cst_34 = arith.constant dense<0.000000e+00> : vector<8x8xf32>
    %67 = tpu.matmul %66, %55, %cst_34 {dimension_numbers = #tpu.dot_dimension_numbers<[1], [0], [0], [1], [0, 0, 1, 1], [], []>} : vector<8x8xf32>, vector<8x8xf32>, vector<8x8xf32> -> vector<8x8xf32>
    %68 = vector.extract_strided_slice %22 {offsets = [0, 24], sizes = [8, 8], strides = [1, 1]} : vector<8x32xf32> to vector<8x8xf32>
    %69 = vector.extract_strided_slice %15 {offsets = [0, 24], sizes = [8, 8], strides = [1, 1]} : vector<8x32xf32> to vector<8x8xf32>
    %70 = vector.extract_strided_slice %20 {offsets = [0, 24], sizes = [8, 8], strides = [1, 1]} : vector<8x32xf32> to vector<8x8xf32>
    %cst_35 = arith.constant dense<0.000000e+00> : vector<8x8xf32>
    %71 = tpu.matmul %68, %69, %cst_35 {dimension_numbers = #tpu.dot_dimension_numbers<[1], [1], [0], [0], [0, 0, 1, 0], [], []>} : vector<8x8xf32>, vector<8x8xf32>, vector<8x8xf32> -> vector<8x8xf32>
    %cst_36 = arith.constant dense<0xFF800000> : vector<8xf32>
    %72 = vector.multi_reduction <maximumf>, %71, %cst_36 [1] : vector<8x8xf32> to vector<8xf32>
    %73 = vector.shape_cast %72 : vector<8xf32> to vector<8x1xf32>
    %74 = vector.broadcast %73 : vector<8x1xf32> to vector<8x8xf32>
    %75 = arith.subf %71, %74 : vector<8x8xf32>
    %76 = math.exp %75 : vector<8x8xf32>
    %cst_37 = arith.constant dense<0.000000e+00> : vector<8xf32>
    %77 = vector.multi_reduction <add>, %76, %cst_37 [1] : vector<8x8xf32> to vector<8xf32>
    %78 = vector.shape_cast %77 : vector<8xf32> to vector<8x1xf32>
    %79 = tpu.reciprocal %78 : vector<8x1xf32> -> vector<8x1xf32>
    %80 = vector.broadcast %79 : vector<8x1xf32> to vector<8x8xf32>
    %81 = arith.mulf %76, %80 : vector<8x8xf32>
    %cst_38 = arith.constant dense<0.000000e+00> : vector<8x8xf32>
    %82 = tpu.matmul %81, %70, %cst_38 {dimension_numbers = #tpu.dot_dimension_numbers<[1], [0], [0], [1], [0, 0, 1, 1], [], []>} : vector<8x8xf32>, vector<8x8xf32>, vector<8x8xf32> -> vector<8x8xf32>
    %83 = tpu.concatenate %37, %52, %67, %82 in 1 : vector<8x8xf32>, vector<8x8xf32>, vector<8x8xf32>, vector<8x8xf32> -> vector<8x32xf32>
    %c0_39 = arith.constant 0 : index
    %c0_40 = arith.constant 0 : index
    %84 = vector.load %arg10[%c0_39, %c0_40] : memref<32x32xf32, #tpu.memory_space<vmem>>, vector<32x32xf32>
    %cst_41 = arith.constant dense<0.000000e+00> : vector<8x32xf32>
    %85 = tpu.matmul %83, %84, %cst_41 {dimension_numbers = #tpu.dot_dimension_numbers<[1], [0], [0], [1], [0, 0, 1, 1], [], []>} : vector<8x32xf32>, vector<32x32xf32>, vector<8x32xf32> -> vector<8x32xf32>
    %c0_42 = arith.constant 0 : index
    %c0_43 = arith.constant 0 : index
    %86 = vector.load %arg11[%c0_42, %c0_43] : memref<1x32xf32, #tpu.memory_space<vmem>>, vector<1x32xf32>
    %87 = vector.broadcast %86 : vector<1x32xf32> to vector<8x32xf32>
    %88 = arith.addf %85, %87 : vector<8x32xf32>
    %c0_44 = arith.constant 0 : index
    %c0_45 = arith.constant 0 : index
    %c0_46 = arith.constant 0 : index
    %89 = vector.load %arg12[%c0_44, %c0_45, %c0_46] : memref<1x8x32xf32, #tpu.memory_space<vmem>>, vector<1x8x32xf32>
    %90 = vector.shape_cast %89 : vector<1x8x32xf32> to vector<8x32xf32>
    %91 = vector.shape_cast %88 : vector<8x32xf32> to vector<1x8x32xf32>
    tpu.vector_store %arg12[%c0_44, %c0_45, %c0_46], %91 {strides = array<i32>} : memref<1x8x32xf32, #tpu.memory_space<vmem>>, vector<1x8x32xf32>,
    return
  }
  func.func @transform_0(%arg0: i32) -> (i32, i32, i32) {
    %c0_i32 = arith.constant 0 : i32
    %c0_i32_0 = arith.constant 0 : i32
    %c0_i32_1 = arith.constant 0 : i32
    return %arg0, %c0_i32, %c0_i32_0 : i32, i32, i32
  }
  func.func @transform_1(%arg0: i32) -> (i32, i32, i32) {
    %c0_i32 = arith.constant 0 : i32
    %c0_i32_0 = arith.constant 0 : i32
    %c0_i32_1 = arith.constant 0 : i32
    return %arg0, %c0_i32, %c0_i32_0 : i32, i32, i32
  }
  func.func @transform_2(%arg0: i32) -> (i32, i32, i32) {
    %c0_i32 = arith.constant 0 : i32
    %c0_i32_0 = arith.constant 0 : i32
    %c0_i32_1 = arith.constant 0 : i32
    return %arg0, %c0_i32, %c0_i32_0 : i32, i32, i32
  }
  func.func @transform_3(%arg0: i32) -> (i32, i32) {
    %c0_i32 = arith.constant 0 : i32
    %c0_i32_0 = arith.constant 0 : i32
    %c0_i32_1 = arith.constant 0 : i32
    return %c0_i32, %c0_i32_0 : i32, i32
  }
  func.func @transform_4(%arg0: i32) -> (i32, i32) {
    %c0_i32 = arith.constant 0 : i32
    %c0_i32_0 = arith.constant 0 : i32
    %c0_i32_1 = arith.constant 0 : i32
    return %c0_i32, %c0_i32_0 : i32, i32
  }
  func.func @transform_5(%arg0: i32) -> (i32, i32) {
    %c0_i32 = arith.constant 0 : i32
    %c0_i32_0 = arith.constant 0 : i32
    %c0_i32_1 = arith.constant 0 : i32
    return %c0_i32, %c0_i32_0 : i32, i32
  }
  func.func @transform_6(%arg0: i32) -> (i32, i32) {
    %c0_i32 = arith.constant 0 : i32
    %c0_i32_0 = arith.constant 0 : i32
    %c0_i32_1 = arith.constant 0 : i32
    return %c0_i32, %c0_i32_0 : i32, i32
  }
  func.func @transform_7(%arg0: i32) -> (i32, i32) {
    %c0_i32 = arith.constant 0 : i32
    %c0_i32_0 = arith.constant 0 : i32
    %c0_i32_1 = arith.constant 0 : i32
    return %c0_i32, %c0_i32_0 : i32, i32
  }
  func.func @transform_8(%arg0: i32) -> (i32, i32) {
    %c0_i32 = arith.constant 0 : i32
    %c0_i32_0 = arith.constant 0 : i32
    %c0_i32_1 = arith.constant 0 : i32
    return %c0_i32, %c0_i32_0 : i32, i32
  }
  func.func @transform_9(%arg0: i32) -> (i32, i32) {
    %c0_i32 = arith.constant 0 : i32
    %c0_i32_0 = arith.constant 0 : i32
    %c0_i32_1 = arith.constant 0 : i32
    return %c0_i32, %c0_i32_0 : i32, i32
  }
  func.func @transform_10(%arg0: i32) -> (i32, i32) {
    %c0_i32 = arith.constant 0 : i32
    %c0_i32_0 = arith.constant 0 : i32
    %c0_i32_1 = arith.constant 0 : i32
    return %c0_i32, %c0_i32_0 : i32, i32
  }
  func.func @transform_11(%arg0: i32) -> (i32, i32, i32) {
    %c0_i32 = arith.constant 0 : i32
    %c0_i32_0 = arith.constant 0 : i32
    %c0_i32_1 = arith.constant 0 : i32
    return %arg0, %c0_i32, %c0_i32_0 : i32, i32, i32
  }
}

</mosaic_0001>

<llo_original>
// kernel: tpu_custom_call.1
$region0: #{tpu_custom_call.1}
  #allocation0 [shape = 'u32[]', space=smem, size = 0x4, offset = 0x4, fixed_abs, tag = 'smem constant byte address 0x4 - core index']
  #allocation1 [shape = 'u32[72,128]{1,0:T(1,128)}', space=vmem, size = 0x9000, scoped, tag = 'internal scratch']
  %s0 = inlined_call_operand.hbm [shape: f32[2,8,32], index: 0, kind: input, shape index: {}]
  %s1 = inlined_call_operand.hbm [shape: f32[2,8,32], index: 1, kind: input, shape index: {}]
  %s2 = inlined_call_operand.hbm [shape: f32[2,8,32], index: 2, kind: input, shape index: {}]
  %s3 = inlined_call_operand.hbm [shape: f32[32,32], index: 3, kind: input, shape index: {}]
  %s4 = inlined_call_operand.vmem [shape: f32[1,32], index: 4, kind: input, shape index: {}]
  %s5 = inlined_call_operand.hbm [shape: f32[32,32], index: 5, kind: input, shape index: {}]
  %s6 = inlined_call_operand.vmem [shape: f32[1,32], index: 6, kind: input, shape index: {}]
  %s7 = inlined_call_operand.hbm [shape: f32[32,32], index: 7, kind: input, shape index: {}]
  %s8 = inlined_call_operand.vmem [shape: f32[1,32], index: 8, kind: input, shape index: {}]
  %s9 = inlined_call_operand.hbm [shape: f32[32,32], index: 9, kind: input, shape index: {}]
  %s10 = inlined_call_operand.vmem [shape: f32[1,32], index: 10, kind: input, shape index: {}]
  %s11 = inlined_call_operand.hbm [shape: f32[2,8,32], index: 11, kind: output, shape index: {}]
  %s12 = sld [smem:[#allocation0]]
  $region105: #{tpu_custom_call.1} parent=0
    _
  %s14 = ssub.s32 1, %s12
  %s15 = scalar_select 0, %s14, %s12
  $region1: #{tpu_custom_call.1} parent=0
    #allocation2 [shape = 'u8[8192]{0}', space=vmem, size = 0x2000, scoped, tag = 'input window, operand 0']
    #allocation3 [shape = 's32[2]{0}', space=sflag, size = 0x8, scoped, tag = 'scoped memory for tpu_custom_call.1']
    #allocation4 [shape = 's32[2]{0}', space=sflag, size = 0x8, scoped, tag = 'scoped memory for tpu_custom_call.1']
    #allocation5 [shape = 'u8[8192]{0}', space=vmem, size = 0x2000, scoped, tag = 'input window, operand 1']
    #allocation6 [shape = 's32[2]{0}', space=sflag, size = 0x8, scoped, tag = 'scoped memory for tpu_custom_call.1']
    #allocation7 [shape = 'u8[8192]{0}', space=vmem, size = 0x2000, scoped, tag = 'input window, operand 2']
    #allocation8 [shape = 'u8[16384]{0}', space=vmem, size = 0x4000, scoped, tag = 'input window, operand 3, single buffered']
    #allocation9 [shape = 's32[1]{0}', space=sflag, size = 0x4, scoped, tag = 'scoped memory for tpu_custom_call.1']
    #allocation10 [shape = 'u8[16384]{0}', space=vmem, size = 0x4000, scoped, tag = 'input window, operand 5, single buffered']
    #allocation11 [shape = 'u8[16384]{0}', space=vmem, size = 0x4000, scoped, tag = 'input window, operand 7, single buffered']
    #allocation12 [shape = 's32[1]{0}', space=sflag, size = 0x4, scoped, tag = 'scoped memory for tpu_custom_call.1']
    #allocation13 [shape = 'u8[16384]{0}', space=vmem, size = 0x4000, scoped, tag = 'input window, operand 9, single buffered']
    #allocation14 [shape = 'u8[8192]{0}', space=vmem, size = 0x2000, scoped, tag = 'output window, operand 0']
    %16 = vsyncpa [#allocation3], 0
    %s17 = scalar_lea.sflag [#allocation3], 1
    %18 = vsyncpa %s17, 0
    %19 = vsyncpa [#allocation6], 0
    %s20 = scalar_lea.sflag [#allocation6], 1
    %21 = vsyncpa %s20, 0
    %22 = vsyncpa [#allocation9], 0
    %23 = vsyncpa [#allocation12], 0
    %24 = vsyncpa [#allocation4], 0
    %s25 = scalar_lea.sflag [#allocation4], 1
    %26 = vsyncpa %s25, 0
    loop: start=0, step=1, limit=4
    $region2: #{tpu_custom_call.1} parent=1 // loop_pre_header
      _
    $region3: #{tpu_custom_call.1} parent=1 // loop_header
      %s28 = sphi 0, %s32
      %p29 = scmp.ge.s32.totalorder %s28, 4
      %s38 = sphi 0, %s40
      %s41 = sphi 0, %s38
      %s42 = sphi 0, %s41
      %s58 = sphi 0, %s42
      %s64 = sphi 0, %s66
      %s67 = sphi 0, %s64
      %s68 = sphi 0, %s67
      %s84 = sphi 0, %s68
      %s90 = sphi 0, %s92
      %s93 = sphi 0, %s90
      %s94 = sphi 0, %s93
      %s110 = sphi 0, %s94
      %s114 = sphi 0, %s114
      %s116 = sphi 0, %s114
      %s117 = sphi 0, %s116
      %s131 = sphi 0, %s117
      %s135 = sphi 0, %s135
      %s137 = sphi 0, %s135
      %s138 = sphi 0, %s137
      %s152 = sphi 0, %s138
      %s156 = sphi 0, %s156
      %s158 = sphi 0, %s156
      %s159 = sphi 0, %s158
      %s173 = sphi 0, %s159
      %s177 = sphi 0, %s177
      %s179 = sphi 0, %s177
      %s180 = sphi 0, %s179
      %s194 = sphi 0, %s180
      %s198 = sphi 0, %s198
      %s200 = sphi 0, %s198
      %s201 = sphi 0, %s200
      %s215 = sphi 0, %s201
      %s219 = sphi 0, %s219
      %s221 = sphi 0, %s219
      %s222 = sphi 0, %s221
      %s236 = sphi 0, %s222
      %s240 = sphi 0, %s240
      %s242 = sphi 0, %s240
      %s243 = sphi 0, %s242
      %s257 = sphi 0, %s243
      %s261 = sphi 0, %s261
      %s263 = sphi 0, %s261
      %s264 = sphi 0, %s263
      %s278 = sphi 0, %s264
      %s284 = sphi 0, %s286
      %s287 = sphi 0, %s284
      %s288 = sphi 0, %s287
      %s304 = sphi 0, %s288
    $region4: #{tpu_custom_call.1} parent=1 // loop_header_branch
      %31 = sbr.rel (%p29) target = $region8
    $region5: #{tpu_custom_call.1} parent=1 // loop_body
      %s33 = ssub.s32 %s28, 1
      %s34 = ssub.s32 %s28, 2
      %s35 = sadd.s32 %s28, 1
      %s36 = ssub.s32 %s28, %s35
      %p37 = scmp.eq.s32.totalorder %s36, 0
      %s39 = sadd.s32 %s38, 1
      %s40 = scalar_select %p37, %s38, %s39
      %p43 = pneg %p37
      %p44 = scmp.eq.s32.totalorder %s28, 1
      %p45 = por %p43, %p44
      %p46 = scmp.ne.s32.totalorder %s38, %s41
      %p47 = scmp.eq.s32.totalorder %s28, 0
      %p48 = por %p46, %p47
      %p49 = scmp.ne.s32.totalorder %s38, %s41
      %p50 = scmp.eq.s32.totalorder %s33, 1
      %p51 = por %p49, %p50
      %p52 = scmp.ne.s32.totalorder %s41, %s42
      %p53 = scmp.eq.s32.totalorder %s33, 0
      %p54 = por %p52, %p53
      %p55 = scmp.ne.s32.totalorder %s41, %s42
      %p56 = scmp.eq.s32.totalorder %s34, 1
      %p57 = por %p55, %p56
      %p59 = scmp.ne.s32.totalorder %s42, %s58
      %p60 = scmp.eq.s32.totalorder %s34, 0
      %p61 = por %p59, %p60
      %s62 = ssub.s32 %s28, %s35
      %p63 = scmp.eq.s32.totalorder %s62, 0
      %s65 = sadd.s32 %s64, 1
      %s66 = scalar_select %p63, %s64, %s65
      %p69 = pneg %p63
      %p70 = scmp.eq.s32.totalorder %s28, 1
      %p71 = por %p69, %p70
      %p72 = scmp.ne.s32.totalorder %s64, %s67
      %p73 = scmp.eq.s32.totalorder %s28, 0
      %p74 = por %p72, %p73
      %p75 = scmp.ne.s32.totalorder %s64, %s67
      %p76 = scmp.eq.s32.totalorder %s33, 1
      %p77 = por %p75, %p76
      %p78 = scmp.ne.s32.totalorder %s67, %s68
      %p79 = scmp.eq.s32.totalorder %s33, 0
      %p80 = por %p78, %p79
      %p81 = scmp.ne.s32.totalorder %s67, %s68
      %p82 = scmp.eq.s32.totalorder %s34, 1
      %p83 = por %p81, %p82
      %p85 = scmp.ne.s32.totalorder %s68, %s84
      %p86 = scmp.eq.s32.totalorder %s34, 0
      %p87 = por %p85, %p86
      %s88 = ssub.s32 %s28, %s35
      %p89 = scmp.eq.s32.totalorder %s88, 0
      %s91 = sadd.s32 %s90, 1
      %s92 = scalar_select %p89, %s90, %s91
      %p95 = pneg %p89
      %p96 = scmp.eq.s32.totalorder %s28, 1
      %p97 = por %p95, %p96
      %p98 = scmp.ne.s32.totalorder %s90, %s93
      %p99 = scmp.eq.s32.totalorder %s28, 0
      %p100 = por %p98, %p99
      %p101 = scmp.ne.s32.totalorder %s90, %s93
      %p102 = scmp.eq.s32.totalorder %s33, 1
      %p103 = por %p101, %p102
      %p104 = scmp.ne.s32.totalorder %s93, %s94
      %p105 = scmp.eq.s32.totalorder %s33, 0
      %p106 = por %p104, %p105
      %p107 = scmp.ne.s32.totalorder %s93, %s94
      %p108 = scmp.eq.s32.totalorder %s34, 1
      %p109 = por %p107, %p108
      %p111 = scmp.ne.s32.totalorder %s94, %s110
      %p112 = scmp.eq.s32.totalorder %s34, 0
      %p113 = por %p111, %p112
      %s115 = sadd.s32 %s114, 1
      %p118 = scmp.eq.s32.totalorder %s28, 1
      %p119 = scmp.ne.s32.totalorder %s114, %s116
      %p120 = scmp.eq.s32.totalorder %s28, 0
      %p121 = por %p119, %p120
      %p122 = scmp.ne.s32.totalorder %s114, %s116
      %p123 = scmp.eq.s32.totalorder %s33, 1
      %p124 = por %p122, %p123
      %p125 = scmp.ne.s32.totalorder %s116, %s117
      %p126 = scmp.eq.s32.totalorder %s33, 0
      %p127 = por %p125, %p126
      %p128 = scmp.ne.s32.totalorder %s116, %s117
      %p129 = scmp.eq.s32.totalorder %s34, 1
      %p130 = por %p128, %p129
      %p132 = scmp.ne.s32.totalorder %s117, %s131
      %p133 = scmp.eq.s32.totalorder %s34, 0
      %p134 = por %p132, %p133
      %s136 = sadd.s32 %s135, 1
      %p139 = scmp.eq.s32.totalorder %s28, 1
      %p140 = scmp.ne.s32.totalorder %s135, %s137
      %p141 = scmp.eq.s32.totalorder %s28, 0
      %p142 = por %p140, %p141
      %p143 = scmp.ne.s32.totalorder %s135, %s137
      %p144 = scmp.eq.s32.totalorder %s33, 1
      %p145 = por %p143, %p144
      %p146 = scmp.ne.s32.totalorder %s137, %s138
      %p147 = scmp.eq.s32.totalorder %s33, 0
      %p148 = por %p146, %p147
      %p149 = scmp.ne.s32.totalorder %s137, %s138
      %p150 = scmp.eq.s32.totalorder %s34, 1
      %p151 = por %p149, %p150
      %p153 = scmp.ne.s32.totalorder %s138, %s152
      %p154 = scmp.eq.s32.totalorder %s34, 0
      %p155 = por %p153, %p154
      %s157 = sadd.s32 %s156, 1
      %p160 = scmp.eq.s32.totalorder %s28, 1
      %p161 = scmp.ne.s32.totalorder %s156, %s158
      %p162 = scmp.eq.s32.totalorder %s28, 0
      %p163 = por %p161, %p162
      %p164 = scmp.ne.s32.totalorder %s156, %s158
      %p165 = scmp.eq.s32.totalorder %s33, 1
      %p166 = por %p164, %p165
      %p167 = scmp.ne.s32.totalorder %s158, %s159
      %p168 = scmp.eq.s32.totalorder %s33, 0
      %p169 = por %p167, %p168
      %p170 = scmp.ne.s32.totalorder %s158, %s159
      %p171 = scmp.eq.s32.totalorder %s34, 1
      %p172 = por %p170, %p171
      %p174 = scmp.ne.s32.totalorder %s159, %s173
      %p175 = scmp.eq.s32.totalorder %s34, 0
      %p176 = por %p174, %p175
      %s178 = sadd.s32 %s177, 1
      %p181 = scmp.eq.s32.totalorder %s28, 1
      %p182 = scmp.ne.s32.totalorder %s177, %s179
      %p183 = scmp.eq.s32.totalorder %s28, 0
      %p184 = por %p182, %p183
      %p185 = scmp.ne.s32.totalorder %s177, %s179
      %p186 = scmp.eq.s32.totalorder %s33, 1
      %p187 = por %p185, %p186
      %p188 = scmp.ne.s32.totalorder %s179, %s180
      %p189 = scmp.eq.s32.totalorder %s33, 0
      %p190 = por %p188, %p189
      %p191 = scmp.ne.s32.totalorder %s179, %s180
      %p192 = scmp.eq.s32.totalorder %s34, 1
      %p193 = por %p191, %p192
      %p195 = scmp.ne.s32.totalorder %s180, %s194
      %p196 = scmp.eq.s32.totalorder %s34, 0
      %p197 = por %p195, %p196
      %s199 = sadd.s32 %s198, 1
      %p202 = scmp.eq.s32.totalorder %s28, 1
      %p203 = scmp.ne.s32.totalorder %s198, %s200
      %p204 = scmp.eq.s32.totalorder %s28, 0
      %p205 = por %p203, %p204
      %p206 = scmp.ne.s32.totalorder %s198, %s200
      %p207 = scmp.eq.s32.totalorder %s33, 1
      %p208 = por %p206, %p207
      %p209 = scmp.ne.s32.totalorder %s200, %s201
      %p210 = scmp.eq.s32.totalorder %s33, 0
      %p211 = por %p209, %p210
      %p212 = scmp.ne.s32.totalorder %s200, %s201
      %p213 = scmp.eq.s32.totalorder %s34, 1
      %p214 = por %p212, %p213
      %p216 = scmp.ne.s32.totalorder %s201, %s215
      %p217 = scmp.eq.s32.totalorder %s34, 0
      %p218 = por %p216, %p217
      %s220 = sadd.s32 %s219, 1
      %p223 = scmp.eq.s32.totalorder %s28, 1
      %p224 = scmp.ne.s32.totalorder %s219, %s221
      %p225 = scmp.eq.s32.totalorder %s28, 0
      %p226 = por %p224, %p225
      %p227 = scmp.ne.s32.totalorder %s219, %s221
      %p228 = scmp.eq.s32.totalorder %s33, 1
      %p229 = por %p227, %p228
      %p230 = scmp.ne.s32.totalorder %s221, %s222
      %p231 = scmp.eq.s32.totalorder %s33, 0
      %p232 = por %p230, %p231
      %p233 = scmp.ne.s32.totalorder %s221, %s222
      %p234 = scmp.eq.s32.totalorder %s34, 1
      %p235 = por %p233, %p234
      %p237 = scmp.ne.s32.totalorder %s222, %s236
      %p238 = scmp.eq.s32.totalorder %s34, 0
      %p239 = por %p237, %p238
      %s241 = sadd.s32 %s240, 1
      %p244 = scmp.eq.s32.totalorder %s28, 1
      %p245 = scmp.ne.s32.totalorder %s240, %s242
      %p246 = scmp.eq.s32.totalorder %s28, 0
      %p247 = por %p245, %p246
      %p248 = scmp.ne.s32.totalorder %s240, %s242
      %p249 = scmp.eq.s32.totalorder %s33, 1
      %p250 = por %p248, %p249
      %p251 = scmp.ne.s32.totalorder %s242, %s243
      %p252 = scmp.eq.s32.totalorder %s33, 0
      %p253 = por %p251, %p252
      %p254 = scmp.ne.s32.totalorder %s242, %s243
      %p255 = scmp.eq.s32.totalorder %s34, 1
      %p256 = por %p254, %p255
      %p258 = scmp.ne.s32.totalorder %s243, %s257
      %p259 = scmp.eq.s32.totalorder %s34, 0
      %p260 = por %p258, %p259
      %s262 = sadd.s32 %s261, 1
      %p265 = scmp.eq.s32.totalorder %s28, 1
      %p266 = scmp.ne.s32.totalorder %s261, %s263
      %p267 = scmp.eq.s32.totalorder %s28, 0
      %p268 = por %p266, %p267
      %p269 = scmp.ne.s32.totalorder %s261, %s263
      %p270 = scmp.eq.s32.totalorder %s33, 1
      %p271 = por %p269, %p270
      %p272 = scmp.ne.s32.totalorder %s263, %s264
      %p273 = scmp.eq.s32.totalorder %s33, 0
      %p274 = por %p272, %p273
      %p275 = scmp.ne.s32.totalorder %s263, %s264
      %p276 = scmp.eq.s32.totalorder %s34, 1
      %p277 = por %p275, %p276
      %p279 = scmp.ne.s32.totalorder %s264, %s278
      %p280 = scmp.eq.s32.totalorder %s34, 0
      %p281 = por %p279, %p280
      %s282 = ssub.s32 %s28, %s35
      %p283 = scmp.eq.s32.totalorder %s282, 0
      %s285 = sadd.s32 %s284, 1
      %s286 = scalar_select %p283, %s284, %s285
      %p289 = pneg %p283
      %p290 = scmp.eq.s32.totalorder %s28, 1
      %p291 = por %p289, %p290
      %p292 = scmp.ne.s32.totalorder %s284, %s287
      %p293 = scmp.eq.s32.totalorder %s28, 0
      %p294 = por %p292, %p293
      %p295 = scmp.ne.s32.totalorder %s284, %s287
      %p296 = scmp.eq.s32.totalorder %s33, 1
      %p297 = por %p295, %p296
      %p298 = scmp.ne.s32.totalorder %s287, %s288
      %p299 = scmp.eq.s32.totalorder %s33, 0
      %p300 = por %p298, %p299
      %p301 = scmp.ne.s32.totalorder %s287, %s288
      %p302 = scmp.eq.s32.totalorder %s34, 1
      %p303 = por %p301, %p302
      %p305 = scmp.ne.s32.totalorder %s288, %s304
      %p306 = scmp.eq.s32.totalorder %s34, 0
      %p307 = por %p305, %p306
      %p308 = scmp.le.s32.totalorder 1, %s28
      %p309 = scmp.lt.s32.totalorder %s28, 3
      %p310 = pnand %p308, %p309
      %p311 = pneg %p310
      // Predicated region
      $region9: #{tpu_custom_call.1} parent=5 // pred_check
        _
      $region10: #{tpu_custom_call.1} parent=5 // pred_check_branch
        %313 = sbr.rel (%p310) target = $region12
      $region11: #{tpu_custom_call.1} parent=5 // pred_region
        %s314 = ssub.s32 %s28, 1
        // Predicated region
        $region13: #{tpu_custom_call.1} parent=11 // pred_check
          %p315 = pneg %p127
        $region14: #{tpu_custom_call.1} parent=11 // pred_check_branch
          %317 = sbr.rel (%p315) target = $region16
        $region15: #{tpu_custom_call.1} parent=11 // pred_region
          %319 = vsyncadd [#allocation9], 0
          %s320 = sshll.u32 %s3, 4
          %s321 = int_to_ptr.hbm [resolvable:$true] %s320
          %s322 = sshll.u32 [#allocation8], 4
          %s323 = int_to_ptr.vmem [resolvable:$true] %s322
          %328 = dma.hbm_to_vmem [thread:$0]  %s321, 512, %s323, [#allocation9], 128, 128, 8
        $region16: #{tpu_custom_call.1} parent=11 // pred_fallthru
          _
        // Predicated region
        $region17: #{tpu_custom_call.1} parent=11 // pred_check
          %p329 = pneg %p148
        $region18: #{tpu_custom_call.1} parent=11 // pred_check_branch
          %331 = sbr.rel (%p329) target = $region20
        $region19: #{tpu_custom_call.1} parent=11 // pred_region
          _
        $region20: #{tpu_custom_call.1} parent=11 // pred_fallthru
          _
        // Predicated region
        $region21: #{tpu_custom_call.1} parent=11 // pred_check
          %p332 = pneg %p169
        $region22: #{tpu_custom_call.1} parent=11 // pred_check_branch
          %334 = sbr.rel (%p332) target = $region24
        $region23: #{tpu_custom_call.1} parent=11 // pred_region
          %336 = vsyncadd [#allocation9], 0
          %s337 = sshll.u32 %s5, 4
          %s338 = int_to_ptr.hbm [resolvable:$true] %s337
          %s339 = sshll.u32 [#allocation10], 4
          %s340 = int_to_ptr.vmem [resolvable:$true] %s339
          %345 = dma.hbm_to_vmem [thread:$0]  %s338, 512, %s340, [#allocation9], 128, 128, 8
        $region24: #{tpu_custom_call.1} parent=11 // pred_fallthru
          _
        // Predicated region
        $region25: #{tpu_custom_call.1} parent=11 // pred_check
          %p346 = pneg %p190
        $region26: #{tpu_custom_call.1} parent=11 // pred_check_branch
          %348 = sbr.rel (%p346) target = $region28
        $region27: #{tpu_custom_call.1} parent=11 // pred_region
          _
        $region28: #{tpu_custom_call.1} parent=11 // pred_fallthru
          _
        // Predicated region
        $region29: #{tpu_custom_call.1} parent=11 // pred_check
          %p349 = pneg %p211
        $region30: #{tpu_custom_call.1} parent=11 // pred_check_branch
          %351 = sbr.rel (%p349) target = $region32
        $region31: #{tpu_custom_call.1} parent=11 // pred_region
          %353 = vsyncadd [#allocation12], 0
          %s354 = sshll.u32 %s7, 4
          %s355 = int_to_ptr.hbm [resolvable:$true] %s354
          %s356 = sshll.u32 [#allocation11], 4
          %s357 = int_to_ptr.vmem [resolvable:$true] %s356
          %362 = dma.hbm_to_vmem [thread:$0]  %s355, 512, %s357, [#allocation12], 128, 128, 8
        $region32: #{tpu_custom_call.1} parent=11 // pred_fallthru
          _
        // Predicated region
        $region33: #{tpu_custom_call.1} parent=11 // pred_check
          %p363 = pneg %p232
        $region34: #{tpu_custom_call.1} parent=11 // pred_check_branch
          %365 = sbr.rel (%p363) target = $region36
        $region35: #{tpu_custom_call.1} parent=11 // pred_region
          _
        $region36: #{tpu_custom_call.1} parent=11 // pred_fallthru
          _
        // Predicated region
        $region37: #{tpu_custom_call.1} parent=11 // pred_check
          %p366 = pneg %p253
        $region38: #{tpu_custom_call.1} parent=11 // pred_check_branch
          %368 = sbr.rel (%p366) target = $region40
        $region39: #{tpu_custom_call.1} parent=11 // pred_region
          %370 = vsyncadd [#allocation12], 0
          %s371 = sshll.u32 %s9, 4
          %s372 = int_to_ptr.hbm [resolvable:$true] %s371
          %s373 = sshll.u32 [#allocation13], 4
          %s374 = int_to_ptr.vmem [resolvable:$true] %s373
          %379 = dma.hbm_to_vmem [thread:$0]  %s372, 512, %s374, [#allocation12], 128, 128, 8
        $region40: #{tpu_custom_call.1} parent=11 // pred_fallthru
          _
        // Predicated region
        $region41: #{tpu_custom_call.1} parent=11 // pred_check
          %p380 = pneg %p274
        $region42: #{tpu_custom_call.1} parent=11 // pred_check_branch
          %382 = sbr.rel (%p380) target = $region44
        $region43: #{tpu_custom_call.1} parent=11 // pred_region
          _
        $region44: #{tpu_custom_call.1} parent=11 // pred_fallthru
          _
      $region12: #{tpu_custom_call.1} parent=5 // pred_fallthru
        _
      %p383 = scmp.lt.s32.totalorder %s28, 2
      // Predicated region
      $region45: #{tpu_custom_call.1} parent=5 // pred_check
        %p384 = pneg %p383
      $region46: #{tpu_custom_call.1} parent=5 // pred_check_branch
        %386 = sbr.rel (%p384) target = $region48
      $region47: #{tpu_custom_call.1} parent=5 // pred_region
        // Predicated region
        $region49: #{tpu_custom_call.1} parent=47 // pred_check
          %p387 = pneg %p48
        $region50: #{tpu_custom_call.1} parent=47 // pred_check_branch
          %389 = sbr.rel (%p387) target = $region52
        $region51: #{tpu_custom_call.1} parent=47 // pred_region
          %s390 = sand.u32 %s38, 1
          %s391 = scalar_lea.sflag [#allocation3], %s390
          %s392 = sand.u32 %s38, 1
          %s393 = smul.addr %s392, 8
          %s394 = scalar_lea.vmem [#allocation2], %s393
          %396 = vsyncadd %s391, 0
          %s397 = smul.addr %s28, 8
          %s398 = scalar_lea.hbm %s0, %s397
          %s400 = sshll.u32 %s398, 4
          %s401 = int_to_ptr.hbm [resolvable:$true] %s400
          %s402 = sshll.u32 %s394, 4
          %s403 = int_to_ptr.vmem [resolvable:$true] %s402
          %405 = dma.hbm_to_vmem [thread:$0]  %s401, 128, %s403, %s391
        $region52: #{tpu_custom_call.1} parent=47 // pred_fallthru
          _
        // Predicated region
        $region53: #{tpu_custom_call.1} parent=47 // pred_check
          %p406 = pneg %p74
        $region54: #{tpu_custom_call.1} parent=47 // pred_check_branch
          %408 = sbr.rel (%p406) target = $region56
        $region55: #{tpu_custom_call.1} parent=47 // pred_region
          %s409 = sand.u32 %s28, 1
          %s410 = scalar_lea.sflag [#allocation6], %s409
          %s411 = sand.u32 %s64, 1
          %s412 = smul.addr %s411, 8
          %s413 = scalar_lea.vmem [#allocation5], %s412
          %415 = vsyncadd %s410, 0
          %s416 = smul.addr %s28, 8
          %s417 = scalar_lea.hbm %s1, %s416
          %s419 = sshll.u32 %s417, 4
          %s420 = int_to_ptr.hbm [resolvable:$true] %s419
          %s421 = sshll.u32 %s413, 4
          %s422 = int_to_ptr.vmem [resolvable:$true] %s421
          %424 = dma.hbm_to_vmem [thread:$0]  %s420, 128, %s422, %s410
        $region56: #{tpu_custom_call.1} parent=47 // pred_fallthru
          _
        // Predicated region
        $region57: #{tpu_custom_call.1} parent=47 // pred_check
          %p425 = pneg %p100
        $region58: #{tpu_custom_call.1} parent=47 // pred_check_branch
          %427 = sbr.rel (%p425) target = $region60
        $region59: #{tpu_custom_call.1} parent=47 // pred_region
          %s428 = sand.u32 %s28, 1
          %s429 = scalar_lea.sflag [#allocation6], %s428
          %s430 = sand.u32 %s90, 1
          %s431 = smul.addr %s430, 8
          %s432 = scalar_lea.vmem [#allocation7], %s431
          %434 = vsyncadd %s429, 0
          %s435 = smul.addr %s28, 8
          %s436 = scalar_lea.hbm %s2, %s435
          %s438 = sshll.u32 %s436, 4
          %s439 = int_to_ptr.hbm [resolvable:$true] %s438
          %s440 = sshll.u32 %s432, 4
          %s441 = int_to_ptr.vmem [resolvable:$true] %s440
          %443 = dma.hbm_to_vmem [thread:$0]  %s439, 128, %s441, %s429
        $region60: #{tpu_custom_call.1} parent=47 // pred_fallthru
          _
      $region48: #{tpu_custom_call.1} parent=5 // pred_fallthru
        _
      %p444 = scmp.le.s32.totalorder 1, %s28
      %p445 = scmp.lt.s32.totalorder %s28, 3
      %p446 = pnand %p444, %p445
      %p447 = pneg %p446
      // Predicated region
      $region61: #{tpu_custom_call.1} parent=5 // pred_check
        _
      $region62: #{tpu_custom_call.1} parent=5 // pred_check_branch
        %449 = sbr.rel (%p446) target = $region64
      $region63: #{tpu_custom_call.1} parent=5 // pred_region
        %s450 = ssub.s32 %s28, 1
        %s451 = sand.u32 %s41, 1
        %s452 = scalar_lea.sflag [#allocation3], %s451
        %s453 = sand.u32 %s41, 1
        %s454 = smul.addr %s453, 8
        %s455 = scalar_lea.vmem [#allocation2], %s454
        // Predicated region
        $region65: #{tpu_custom_call.1} parent=63 // pred_check
          %p456 = pneg %p54
        $region66: #{tpu_custom_call.1} parent=63 // pred_check_branch
          %458 = sbr.rel (%p456) target = $region68
        $region67: #{tpu_custom_call.1} parent=63 // pred_region
          %460 = dma.done %s452, 128
        $region68: #{tpu_custom_call.1} parent=63 // pred_fallthru
          _
        %s461 = sand.u32 %s33, 1
        %s462 = scalar_lea.sflag [#allocation6], %s461
        %s463 = sand.u32 %s67, 1
        %s464 = smul.addr %s463, 8
        %s465 = scalar_lea.vmem [#allocation5], %s464
        // Predicated region
        $region69: #{tpu_custom_call.1} parent=63 // pred_check
          %p466 = pneg %p80
        $region70: #{tpu_custom_call.1} parent=63 // pred_check_branch
          %468 = sbr.rel (%p466) target = $region72
        $region71: #{tpu_custom_call.1} parent=63 // pred_region
          %470 = dma.done %s462, 128
        $region72: #{tpu_custom_call.1} parent=63 // pred_fallthru
          _
        %s471 = sand.u32 %s33, 1
        %s472 = scalar_lea.sflag [#allocation6], %s471
        %s473 = sand.u32 %s93, 1
        %s474 = smul.addr %s473, 8
        %s475 = scalar_lea.vmem [#allocation7], %s474
        // Predicated region
        $region73: #{tpu_custom_call.1} parent=63 // pred_check
          %p476 = pneg %p106
        $region74: #{tpu_custom_call.1} parent=63 // pred_check_branch
          %478 = sbr.rel (%p476) target = $region76
        $region75: #{tpu_custom_call.1} parent=63 // pred_region
          %480 = dma.done %s472, 128
        $region76: #{tpu_custom_call.1} parent=63 // pred_fallthru
          _
        // Predicated region
        $region77: #{tpu_custom_call.1} parent=63 // pred_check
          %p481 = pneg %p127
        $region78: #{tpu_custom_call.1} parent=63 // pred_check_branch
          %483 = sbr.rel (%p481) target = $region80
        $region79: #{tpu_custom_call.1} parent=63 // pred_region
          %485 = dma.done [#allocation9], 512
        $region80: #{tpu_custom_call.1} parent=63 // pred_fallthru
          _
        // Predicated region
        $region81: #{tpu_custom_call.1} parent=63 // pred_check
          %p486 = pneg %p169
        $region82: #{tpu_custom_call.1} parent=63 // pred_check_branch
          %488 = sbr.rel (%p486) target = $region84
        $region83: #{tpu_custom_call.1} parent=63 // pred_region
          %490 = dma.done [#allocation9], 512
        $region84: #{tpu_custom_call.1} parent=63 // pred_fallthru
          _
        // Predicated region
        $region85: #{tpu_custom_call.1} parent=63 // pred_check
          %p491 = pneg %p211
        $region86: #{tpu_custom_call.1} parent=63 // pred_check_branch
          %493 = sbr.rel (%p491) target = $region88
        $region87: #{tpu_custom_call.1} parent=63 // pred_region
          %495 = dma.done [#allocation12], 512
        $region88: #{tpu_custom_call.1} parent=63 // pred_fallthru
          _
        // Predicated region
        $region89: #{tpu_custom_call.1} parent=63 // pred_check
          %p496 = pneg %p253
        $region90: #{tpu_custom_call.1} parent=63 // pred_check_branch
          %498 = sbr.rel (%p496) target = $region92
        $region91: #{tpu_custom_call.1} parent=63 // pred_region
          %500 = dma.done [#allocation12], 512
        $region92: #{tpu_custom_call.1} parent=63 // pred_fallthru
          _
        %s501 = sand.u32 %s41, 1
        %s502 = scalar_lea.sflag [#allocation3], %s501
        %s503 = sand.u32 %s41, 1
        %s504 = smul.addr %s503, 8
        %s505 = scalar_lea.vmem [#allocation2], %s504
        %p506 = pneg %p54
        %p507 = pneg %p51
        %s508 = sand.u32 %s33, 1
        %s509 = scalar_lea.sflag [#allocation6], %s508
        %s510 = sand.u32 %s67, 1
        %s511 = smul.addr %s510, 8
        %s512 = scalar_lea.vmem [#allocation5], %s511
        %p513 = pneg %p80
        %p514 = pneg %p77
        %s515 = sand.u32 %s33, 1
        %s516 = scalar_lea.sflag [#allocation6], %s515
        %s517 = sand.u32 %s93, 1
        %s518 = smul.addr %s517, 8
        %s519 = scalar_lea.vmem [#allocation7], %s518
        %p520 = pneg %p106
        %p521 = pneg %p103
        %p522 = pneg %p127
        %p523 = pneg %p124
        %p524 = pneg %p148
        %p525 = pneg %p145
        %p526 = pneg %p169
        %p527 = pneg %p166
        %p528 = pneg %p190
        %p529 = pneg %p187
        %p530 = pneg %p211
        %p531 = pneg %p208
        %p532 = pneg %p232
        %p533 = pneg %p229
        %p534 = pneg %p253
        %p535 = pneg %p250
        %p536 = pneg %p274
        %p537 = pneg %p271
        %p538 = pneg %p300
        %p539 = pneg %p297
        %s540 = sand.u32 %s287, 1
        %s541 = scalar_lea.sflag [#allocation4], %s540
        %s542 = sand.u32 %s287, 1
        %s543 = smul.addr %s542, 8
        %s544 = scalar_lea.vmem [#allocation14], %s543
        %v545 = vld [vmem:[%s455] sm:$0xff]
        %v546 = vld [vmem:[%s465] sm:$0xff]
        %v547 = vld [vmem:[%s475] sm:$0xff]
        %v548 = vld [vmem:[#allocation8] sm:$0xff]
        %v549 = vld [vmem:[#allocation8 + $0x8] sm:$0xff]
        %v550 = vld [vmem:[#allocation8 + $0x10] sm:$0xff]
        %v551 = vld [vmem:[#allocation8 + $0x18] sm:$0xff]
        %v552 = vld [vmem:[%s4] sm:$0x1]
        %v554 = vperm.slane %v552, 0
        %vm556 = vcmask 261120
        %v558 = vsel %vm556, %v545, 0
        %560 = vmatpush.msra.mxu0 0.0
        %561 = vmatpush.msra.mxu0 0.0
        %562 = vmatpush.msra.mxu0 0.0
        %563 = vmatpush.msra.mxu0 0.0
        %564 = vmatpush.msra.mxu0 0.0
        %565 = vmatpush.msra.mxu0 0.0
        %566 = vmatpush.msra.mxu0 0.0
        %567 = vmatpush.msra.mxu0 0.0
        %568 = vmatpush.msra.mxu0 0.0
        %569 = vmatpush.msra.mxu0 0.0
        %570 = vmatpush.msra.mxu0 0.0
        %571 = vmatpush.msra.mxu0 0.0
        %572 = vmatpush.msra.mxu0 %v551
        %573 = vmatpush.msra.mxu0 %v550
        %574 = vmatpush.msra.mxu0 %v549
        %575 = vmatpush.msra.mxu0 %v548
        %576 = vmatmul.f32.gmra.mxu0 %v558
        %v577 = vpop.f32.mrf.mxu0
        %v578 = vadd.f32 %v554, %v577
        %579 = vdwg.mxu0
        %v580 = vld [vmem:[#allocation10] sm:$0xff]
        %v581 = vld [vmem:[#allocation10 + $0x8] sm:$0xff]
        %v582 = vld [vmem:[#allocation10 + $0x10] sm:$0xff]
        %v583 = vld [vmem:[#allocation10 + $0x18] sm:$0xff]
        %v584 = vld [vmem:[%s6] sm:$0x1]
        %v586 = vperm.slane %v584, 0
        %v589 = vsel %vm556, %v546, 0
        %591 = vmatpush.msra.mxu0 0.0
        %592 = vmatpush.msra.mxu0 0.0
        %593 = vmatpush.msra.mxu0 0.0
        %594 = vmatpush.msra.mxu0 0.0
        %595 = vmatpush.msra.mxu0 0.0
        %596 = vmatpush.msra.mxu0 0.0
        %597 = vmatpush.msra.mxu0 0.0
        %598 = vmatpush.msra.mxu0 0.0
        %599 = vmatpush.msra.mxu0 0.0
        %600 = vmatpush.msra.mxu0 0.0
        %601 = vmatpush.msra.mxu0 0.0
        %602 = vmatpush.msra.mxu0 0.0
        %603 = vmatpush.msra.mxu0 %v583
        %604 = vmatpush.msra.mxu0 %v582
        %605 = vmatpush.msra.mxu0 %v581
        %606 = vmatpush.msra.mxu0 %v580
        %607 = vmatmul.f32.gmra.mxu0 %v589
        %v608 = vpop.f32.mrf.mxu0
        %v609 = vadd.f32 %v586, %v608
        %610 = vdwg.mxu0
        %v611 = vld [vmem:[#allocation11] sm:$0xff]
        %v612 = vld [vmem:[#allocation11 + $0x8] sm:$0xff]
        %v613 = vld [vmem:[#allocation11 + $0x10] sm:$0xff]
        %v614 = vld [vmem:[#allocation11 + $0x18] sm:$0xff]
        %v615 = vld [vmem:[%s8] sm:$0x1]
        %v617 = vperm.slane %v615, 0
        %v620 = vsel %vm556, %v547, 0
        %622 = vmatpush.msra.mxu0 0.0
        %623 = vmatpush.msra.mxu0 0.0
        %624 = vmatpush.msra.mxu0 0.0
        %625 = vmatpush.msra.mxu0 0.0
        %626 = vmatpush.msra.mxu0 0.0
        %627 = vmatpush.msra.mxu0 0.0
        %628 = vmatpush.msra.mxu0 0.0
        %629 = vmatpush.msra.mxu0 0.0
        %630 = vmatpush.msra.mxu0 0.0
        %631 = vmatpush.msra.mxu0 0.0
        %632 = vmatpush.msra.mxu0 0.0
        %633 = vmatpush.msra.mxu0 0.0
        %634 = vmatpush.msra.mxu0 %v614
        %635 = vmatpush.msra.mxu0 %v613
        %636 = vmatpush.msra.mxu0 %v612
        %637 = vmatpush.msra.mxu0 %v611
        %638 = vmatmul.f32.gmra.mxu0 %v620
        %v639 = vpop.f32.mrf.mxu0
        %v640 = vadd.f32 %v617, %v639
        %641 = vdwg.mxu0
        %v642 = vmul.f32 %v578, 0.35355338
        %vm643 = vcmask 64512
        %v645 = vsel %vm643, %v642, 0
        %v648 = vsel %vm643, %v609, 0
        %650 = vmatpush.xpose.msra.mxu0 0.0
        %651 = vmatpush.xpose.msra.mxu0 0.0
        %652 = vmatpush.xpose.msra.mxu0 0.0
        %653 = vmatpush.xpose.msra.mxu0 0.0
        %654 = vmatpush.xpose.msra.mxu0 0.0
        %655 = vmatpush.xpose.msra.mxu0 0.0
        %656 = vmatpush.xpose.msra.mxu0 0.0
        %657 = vmatpush.xpose.msra.mxu0 0.0
        %658 = vmatpush.xpose.msra.mxu0 0.0
        %659 = vmatpush.xpose.msra.mxu0 0.0
        %660 = vmatpush.xpose.msra.mxu0 0.0
        %661 = vmatpush.xpose.msra.mxu0 0.0
        %662 = vmatpush.xpose.msra.mxu0 0.0
        %663 = vmatpush.xpose.msra.mxu0 0.0
        %664 = vmatpush.xpose.msra.mxu0 0.0
        %665 = vmatpush.xpose.msra.mxu0 %v648
        %666 = vmatmul.f32.gmra.mxu0 %v645
        %v667 = vpop.f32.mrf.mxu0
        %v668 = vadd.f32 0.0, %v667
        %669 = vdwg.mxu0
        %v670 = vsel %vm643, %v668, -inf
        %671 = vmax.xlane.f32.xlu0 %v670
        %v672 = vpop.xlane.xlu0 %671
        %v673 = vsub.f32 %v668, %v672
        %v674 = vmul.f32 %v673, 1.442695
        %v675 = vpow.pop %v674
        %v676 = vsel %vm643, %v675, 0.0
        %677 = vadd.xlane.f32.xlu0 %v676
        %v678 = vpop.xlane.xlu0 %677
        %v679 = vrcp.pop %v678
        %v680 = vmul.f32 %v678, %v679
        %v681 = vsub.f32 1.0, %v680
        %v682 = vmul.f32 %v679, %v681
        %v683 = vadd.f32 %v679, %v682
        %vm684 = vweird.f32 %v678
        %vm685 = vweird.f32 %v679
        %vm686 = vmor %vm684, %vm685
        %v687 = vsel %vm686, %v679, %v683
        %v688 = vand.u32 2147483647, %v678
        %vm689 = vcmp.eq.f32.partialorder %v688, 8.507059e+37
        %v690 = vand.u32 %v678, 2147483648
        %v691 = vor.u32 1.1754944e-38, %v690
        %v692 = vsel %vm689, %v691, %v687
        %v693 = vmul.f32 %v675, %v692
        %v695 = vsel %vm643, %v693, 0
        %697 = vmatpush.msra.mxu0 0.0
        %698 = vmatpush.msra.mxu0 0.0
        %699 = vmatpush.msra.mxu0 0.0
        %700 = vmatpush.msra.mxu0 0.0
        %701 = vmatpush.msra.mxu0 0.0
        %702 = vmatpush.msra.mxu0 0.0
        %703 = vmatpush.msra.mxu0 0.0
        %704 = vmatpush.msra.mxu0 0.0
        %705 = vmatpush.msra.mxu0 0.0
        %706 = vmatpush.msra.mxu0 0.0
        %707 = vmatpush.msra.mxu0 0.0
        %708 = vmatpush.msra.mxu0 0.0
        %709 = vmatpush.msra.mxu0 0.0
        %710 = vmatpush.msra.mxu0 0.0
        %711 = vmatpush.msra.mxu0 0.0
        %712 = vmatpush.msra.mxu0 %v640
        %713 = vmatmul.f32.gmra.mxu0 %v695
        %v714 = vpop.f32.mrf.mxu0
        %v715 = vadd.f32 0.0, %v714
        %716 = vdwg.mxu0
        %717 = vrot.lane.b32.xlu0 %v642, 120
        %v718 = vpop.permute.xlu0 %717
        %719 = vrot.lane.b32.xlu0 %v609, 120
        %v720 = vpop.permute.xlu0 %719
        %v721 = vsel %vm643, %v718, 0
        %v723 = vsel %vm643, %v720, 0
        %725 = vmatpush.xpose.msra.mxu0 0.0
        %726 = vmatpush.xpose.msra.mxu0 0.0
        %727 = vmatpush.xpose.msra.mxu0 0.0
        %728 = vmatpush.xpose.msra.mxu0 0.0
        %729 = vmatpush.xpose.msra.mxu0 0.0
        %730 = vmatpush.xpose.msra.mxu0 0.0
        %731 = vmatpush.xpose.msra.mxu0 0.0
        %732 = vmatpush.xpose.msra.mxu0 0.0
        %733 = vmatpush.xpose.msra.mxu0 0.0
        %734 = vmatpush.xpose.msra.mxu0 0.0
        %735 = vmatpush.xpose.msra.mxu0 0.0
        %736 = vmatpush.xpose.msra.mxu0 0.0
        %737 = vmatpush.xpose.msra.mxu0 0.0
        %738 = vmatpush.xpose.msra.mxu0 0.0
        %739 = vmatpush.xpose.msra.mxu0 0.0
        %740 = vmatpush.xpose.msra.mxu0 %v723
        %741 = vmatmul.f32.gmra.mxu0 %v721
        %v742 = vpop.f32.mrf.mxu0
        %v743 = vadd.f32 0.0, %v742
        %744 = vdwg.mxu0
        %v745 = vsel %vm643, %v743, -inf
        %746 = vmax.xlane.f32.xlu0 %v745
        %v747 = vpop.xlane.xlu0 %746
        %v748 = vsub.f32 %v743, %v747
        %v749 = vmul.f32 %v748, 1.442695
        %v750 = vpow.pop %v749
        %v751 = vsel %vm643, %v750, 0.0
        %752 = vadd.xlane.f32.xlu0 %v751
        %v753 = vpop.xlane.xlu0 %752
        %v754 = vrcp.pop %v753
        %v755 = vmul.f32 %v753, %v754
        %v756 = vsub.f32 1.0, %v755
        %v757 = vmul.f32 %v754, %v756
        %v758 = vadd.f32 %v754, %v757
        %vm759 = vweird.f32 %v753
        %vm760 = vweird.f32 %v754
        %vm761 = vmor %vm759, %vm760
        %v762 = vsel %vm761, %v754, %v758
        %v763 = vand.u32 2147483647, %v753
        %vm764 = vcmp.eq.f32.partialorder %v763, 8.507059e+37
        %v765 = vand.u32 %v753, 2147483648
        %v766 = vor.u32 1.1754944e-38, %v765
        %v767 = vsel %vm764, %v766, %v762
        %v768 = vmul.f32 %v750, %v767
        %770 = vrot.lane.b32.xlu0 %v640, 120
        %v771 = vpop.permute.xlu0 %770
        %v774 = vsel %vm643, %v768, 0
        %776 = vmatpush.msra.mxu0 0.0
        %777 = vmatpush.msra.mxu0 0.0
        %778 = vmatpush.msra.mxu0 0.0
        %779 = vmatpush.msra.mxu0 0.0
        %780 = vmatpush.msra.mxu0 0.0
        %781 = vmatpush.msra.mxu0 0.0
        %782 = vmatpush.msra.mxu0 0.0
        %783 = vmatpush.msra.mxu0 0.0
        %784 = vmatpush.msra.mxu0 0.0
        %785 = vmatpush.msra.mxu0 0.0
        %786 = vmatpush.msra.mxu0 0.0
        %787 = vmatpush.msra.mxu0 0.0
        %788 = vmatpush.msra.mxu0 0.0
        %789 = vmatpush.msra.mxu0 0.0
        %790 = vmatpush.msra.mxu0 0.0
        %791 = vmatpush.msra.mxu0 %v771
        %792 = vmatmul.f32.gmra.mxu0 %v774
        %v793 = vpop.f32.mrf.mxu0
        %v794 = vadd.f32 0.0, %v793
        %795 = vdwg.mxu0
        %796 = vrot.lane.b32.xlu0 %v642, 112
        %v797 = vpop.permute.xlu0 %796
        %798 = vrot.lane.b32.xlu0 %v609, 112
        %v799 = vpop.permute.xlu0 %798
        %v800 = vsel %vm643, %v797, 0
        %v802 = vsel %vm643, %v799, 0
        %804 = vmatpush.xpose.msra.mxu0 0.0
        %805 = vmatpush.xpose.msra.mxu0 0.0
        %806 = vmatpush.xpose.msra.mxu0 0.0
        %807 = vmatpush.xpose.msra.mxu0 0.0
        %808 = vmatpush.xpose.msra.mxu0 0.0
        %809 = vmatpush.xpose.msra.mxu0 0.0
        %810 = vmatpush.xpose.msra.mxu0 0.0
        %811 = vmatpush.xpose.msra.mxu0 0.0
        %812 = vmatpush.xpose.msra.mxu0 0.0
        %813 = vmatpush.xpose.msra.mxu0 0.0
        %814 = vmatpush.xpose.msra.mxu0 0.0
        %815 = vmatpush.xpose.msra.mxu0 0.0
        %816 = vmatpush.xpose.msra.mxu0 0.0
        %817 = vmatpush.xpose.msra.mxu0 0.0
        %818 = vmatpush.xpose.msra.mxu0 0.0
        %819 = vmatpush.xpose.msra.mxu0 %v802
        %820 = vmatmul.f32.gmra.mxu0 %v800
        %v821 = vpop.f32.mrf.mxu0
        %v822 = vadd.f32 0.0, %v821
        %823 = vdwg.mxu0
        %v824 = vsel %vm643, %v822, -inf
        %825 = vmax.xlane.f32.xlu0 %v824
        %v826 = vpop.xlane.xlu0 %825
        %v827 = vsub.f32 %v822, %v826
        %v828 = vmul.f32 %v827, 1.442695
        %v829 = vpow.pop %v828
        %v830 = vsel %vm643, %v829, 0.0
        %831 = vadd.xlane.f32.xlu0 %v830
        %v832 = vpop.xlane.xlu0 %831
        %v833 = vrcp.pop %v832
        %v834 = vmul.f32 %v832, %v833
        %v835 = vsub.f32 1.0, %v834
        %v836 = vmul.f32 %v833, %v835
        %v837 = vadd.f32 %v833, %v836
        %vm838 = vweird.f32 %v832
        %vm839 = vweird.f32 %v833
        %vm840 = vmor %vm838, %vm839
        %v841 = vsel %vm840, %v833, %v837
        %v842 = vand.u32 2147483647, %v832
        %vm843 = vcmp.eq.f32.partialorder %v842, 8.507059e+37
        %v844 = vand.u32 %v832, 2147483648
        %v845 = vor.u32 1.1754944e-38, %v844
        %v846 = vsel %vm843, %v845, %v841
        %v847 = vmul.f32 %v829, %v846
        %848 = vrot.lane.b32.xlu0 %v640, 112
        %v849 = vpop.permute.xlu0 %848
        %v852 = vsel %vm643, %v847, 0
        %854 = vmatpush.msra.mxu0 0.0
        %855 = vmatpush.msra.mxu0 0.0
        %856 = vmatpush.msra.mxu0 0.0
        %857 = vmatpush.msra.mxu0 0.0
        %858 = vmatpush.msra.mxu0 0.0
        %859 = vmatpush.msra.mxu0 0.0
        %860 = vmatpush.msra.mxu0 0.0
        %861 = vmatpush.msra.mxu0 0.0
        %862 = vmatpush.msra.mxu0 0.0
        %863 = vmatpush.msra.mxu0 0.0
        %864 = vmatpush.msra.mxu0 0.0
        %865 = vmatpush.msra.mxu0 0.0
        %866 = vmatpush.msra.mxu0 0.0
        %867 = vmatpush.msra.mxu0 0.0
        %868 = vmatpush.msra.mxu0 0.0
        %869 = vmatpush.msra.mxu0 %v849
        %870 = vmatmul.f32.gmra.mxu0 %v852
        %v871 = vpop.f32.mrf.mxu0
        %v872 = vadd.f32 0.0, %v871
        %873 = vdwg.mxu0
        %874 = vrot.lane.b32.xlu0 %v642, 104
        %v875 = vpop.permute.xlu0 %874
        %876 = vrot.lane.b32.xlu0 %v609, 104
        %v877 = vpop.permute.xlu0 %876
        %v878 = vsel %vm643, %v875, 0
        %v880 = vsel %vm643, %v877, 0
        %882 = vmatpush.xpose.msra.mxu0 0.0
        %883 = vmatpush.xpose.msra.mxu0 0.0
        %884 = vmatpush.xpose.msra.mxu0 0.0
        %885 = vmatpush.xpose.msra.mxu0 0.0
        %886 = vmatpush.xpose.msra.mxu0 0.0
        %887 = vmatpush.xpose.msra.mxu0 0.0
        %888 = vmatpush.xpose.msra.mxu0 0.0
        %889 = vmatpush.xpose.msra.mxu0 0.0
        %890 = vmatpush.xpose.msra.mxu0 0.0
        %891 = vmatpush.xpose.msra.mxu0 0.0
        %892 = vmatpush.xpose.msra.mxu0 0.0
        %893 = vmatpush.xpose.msra.mxu0 0.0
        %894 = vmatpush.xpose.msra.mxu0 0.0
        %895 = vmatpush.xpose.msra.mxu0 0.0
        %896 = vmatpush.xpose.msra.mxu0 0.0
        %897 = vmatpush.xpose.msra.mxu0 %v880
        %898 = vmatmul.f32.gmra.mxu0 %v878
        %v899 = vpop.f32.mrf.mxu0
        %v900 = vadd.f32 0.0, %v899
        %901 = vdwg.mxu0
        %v902 = vsel %vm643, %v900, -inf
        %903 = vmax.xlane.f32.xlu0 %v902
        %v904 = vpop.xlane.xlu0 %903
        %v905 = vsub.f32 %v900, %v904
        %v906 = vmul.f32 %v905, 1.442695
        %v907 = vpow.pop %v906
        %v908 = vsel %vm643, %v907, 0.0
        %909 = vadd.xlane.f32.xlu0 %v908
        %v910 = vpop.xlane.xlu0 %909
        %v911 = vrcp.pop %v910
        %v912 = vmul.f32 %v910, %v911
        %v913 = vsub.f32 1.0, %v912
        %v914 = vmul.f32 %v911, %v913
        %v915 = vadd.f32 %v911, %v914
        %vm916 = vweird.f32 %v910
        %vm917 = vweird.f32 %v911
        %vm918 = vmor %vm916, %vm917
        %v919 = vsel %vm918, %v911, %v915
        %v920 = vand.u32 2147483647, %v910
        %vm921 = vcmp.eq.f32.partialorder %v920, 8.507059e+37
        %v922 = vand.u32 %v910, 2147483648
        %v923 = vor.u32 1.1754944e-38, %v922
        %v924 = vsel %vm921, %v923, %v919
        %v925 = vmul.f32 %v907, %v924
        %926 = vrot.lane.b32.xlu0 %v640, 104
        %v927 = vpop.permute.xlu0 %926
        %v930 = vsel %vm643, %v925, 0
        %932 = vmatpush.msra.mxu0 0.0
        %933 = vmatpush.msra.mxu0 0.0
        %934 = vmatpush.msra.mxu0 0.0
        %935 = vmatpush.msra.mxu0 0.0
        %936 = vmatpush.msra.mxu0 0.0
        %937 = vmatpush.msra.mxu0 0.0
        %938 = vmatpush.msra.mxu0 0.0
        %939 = vmatpush.msra.mxu0 0.0
        %940 = vmatpush.msra.mxu0 0.0
        %941 = vmatpush.msra.mxu0 0.0
        %942 = vmatpush.msra.mxu0 0.0
        %943 = vmatpush.msra.mxu0 0.0
        %944 = vmatpush.msra.mxu0 0.0
        %945 = vmatpush.msra.mxu0 0.0
        %946 = vmatpush.msra.mxu0 0.0
        %947 = vmatpush.msra.mxu0 %v927
        %948 = vmatmul.f32.gmra.mxu0 %v930
        %v949 = vpop.f32.mrf.mxu0
        %v950 = vadd.f32 0.0, %v949
        %951 = vdwg.mxu0
        %953 = vrot.lane.b32.xlu0 %v794, 8
        %v954 = vpop.permute.xlu0 %953
        %957 = vrot.lane.b32.xlu0 %v872, 16
        %v958 = vpop.permute.xlu0 %957
        %961 = vrot.lane.b32.xlu0 %v950, 24
        %v962 = vpop.permute.xlu0 %961
        %v964 = vsel %vm643, %v715, %v954
        %vm965 = vcmask 130048
        %v966 = vsel %vm965, %v964, %v958
        %vm967 = vcmask 195584
        %v968 = vsel %vm967, %v966, %v962
        %v969 = vld [vmem:[#allocation13] sm:$0xff]
        %v970 = vld [vmem:[#allocation13 + $0x8] sm:$0xff]
        %v971 = vld [vmem:[#allocation13 + $0x10] sm:$0xff]
        %v972 = vld [vmem:[#allocation13 + $0x18] sm:$0xff]
        %v973 = vld [vmem:[%s10] sm:$0x1]
        %v975 = vperm.slane %v973, 0
        %v978 = vsel %vm556, %v968, 0
        %980 = vmatpush.msra.mxu0 0.0
        %981 = vmatpush.msra.mxu0 0.0
        %982 = vmatpush.msra.mxu0 0.0
        %983 = vmatpush.msra.mxu0 0.0
        %984 = vmatpush.msra.mxu0 0.0
        %985 = vmatpush.msra.mxu0 0.0
        %986 = vmatpush.msra.mxu0 0.0
        %987 = vmatpush.msra.mxu0 0.0
        %988 = vmatpush.msra.mxu0 0.0
        %989 = vmatpush.msra.mxu0 0.0
        %990 = vmatpush.msra.mxu0 0.0
        %991 = vmatpush.msra.mxu0 0.0
        %992 = vmatpush.msra.mxu0 %v972
        %993 = vmatpush.msra.mxu0 %v971
        %994 = vmatpush.msra.mxu0 %v970
        %995 = vmatpush.msra.mxu0 %v969
        %996 = vmatmul.f32.gmra.mxu0 %v978
        %v997 = vpop.f32.mrf.mxu0
        %v998 = vadd.f32 %v975, %v997
        %999 = vdwg.mxu0
        %1000 = vst.msk [vmem:[%s544] sm:$0xff] %vm556, %v998
        %s1001 = sand.u32 %s287, 1
        %s1002 = scalar_lea.sflag [#allocation4], %s1001
        %s1003 = sand.u32 %s287, 1
        %s1004 = smul.addr %s1003, 8
        %s1005 = scalar_lea.vmem [#allocation14], %s1004
        // Predicated region
        $region93: #{tpu_custom_call.1} parent=63 // pred_check
          %p1006 = pneg %p297
        $region94: #{tpu_custom_call.1} parent=63 // pred_check_branch
          %1008 = sbr.rel (%p1006) target = $region96
        $region95: #{tpu_custom_call.1} parent=63 // pred_region
          %1010 = vsyncadd %s1002, 0
          %s1011 = smul.addr %s33, 8
          %s1012 = scalar_lea.hbm %s11, %s1011
          %s1014 = sshll.u32 %s1005, 4
          %s1015 = int_to_ptr.vmem [resolvable:$true] %s1014
          %s1016 = sshll.u32 %s1012, 4
          %s1017 = int_to_ptr.hbm [resolvable:$true] %s1016
          %1019 = dma.vmem_to_hbm [thread:$0]  %s1015, 128, %s1017, %s1002
        $region96: #{tpu_custom_call.1} parent=63 // pred_fallthru
          _
      $region64: #{tpu_custom_call.1} parent=5 // pred_fallthru
        _
      %p1020 = scmp.le.s32.totalorder 2, %s28
      // Predicated region
      $region97: #{tpu_custom_call.1} parent=5 // pred_check
        %p1021 = pneg %p1020
      $region98: #{tpu_custom_call.1} parent=5 // pred_check_branch
        %1023 = sbr.rel (%p1021) target = $region100
      $region99: #{tpu_custom_call.1} parent=5 // pred_region
        %s1024 = ssub.s32 %s28, 2
        // Predicated region
        $region101: #{tpu_custom_call.1} parent=99 // pred_check
          %p1025 = pneg %p303
        $region102: #{tpu_custom_call.1} parent=99 // pred_check_branch
          %1027 = sbr.rel (%p1025) target = $region104
        $region103: #{tpu_custom_call.1} parent=99 // pred_region
          %s1028 = sand.u32 %s288, 1
          %s1029 = scalar_lea.sflag [#allocation4], %s1028
          %s1030 = sand.u32 %s288, 1
          %s1031 = smul.addr %s1030, 8
          %s1032 = scalar_lea.vmem [#allocation14], %s1031
          %1034 = dma.done %s1029, 128
        $region104: #{tpu_custom_call.1} parent=99 // pred_fallthru
          _
      $region100: #{tpu_custom_call.1} parent=5 // pred_fallthru
        _
    $region6: #{tpu_custom_call.1} parent=1 // loop_footer
      %s32 = sadd.s32 1, %s28
    $region7: #{tpu_custom_call.1} parent=1 // loop_footer_branch
      %27 = sbr.rel target = $region3
    $region8: #{tpu_custom_call.1} parent=1 // loop_exit
      _
    %1035 = vsyncpa [#allocation3], 1
    %s1036 = scalar_lea.sflag [#allocation3], 1
    %1037 = vsyncpa %s1036, 1
    %1038 = vsyncpa [#allocation6], 1
    %s1039 = scalar_lea.sflag [#allocation6], 1
    %1040 = vsyncpa %s1039, 1
    %1041 = vsyncpa [#allocation9], 1
    %1042 = vsyncpa [#allocation12], 1
    %1043 = vsyncpa [#allocation4], 1
    %s1044 = scalar_lea.sflag [#allocation4], 1
    %1045 = vsyncpa %s1044, 1

</llo_original>
